<compile_context>
chip_gen: v7x
topology: tpu7x:2x2x1
jax: 0.10.0
libtpu: 0.0.40
codegen_flags: <defaults>
</compile_context>

<pallas_src>
import functools

import jax
import jax.numpy as jnp
from jax.experimental import pallas as pl
from jax.experimental.pallas import tpu as pltpu


def _round_up(x: int, m: int) -> int:
    return ((x + m - 1) // m) * m


# ----------------------------------------------------------------------------
# Pallas kernel
# ----------------------------------------------------------------------------
def tra_kernel(
    hidden_ref,      # [N, D]
    histx_ref,       # [T*N, K]   hist_loss, time-major and flattened
    slab_ref,        # [R, W]     packed params + gumbel noise (see wrapper)
    out_ref,         # [N, 2K+1]  packed outputs: [preds | prob | final]
    *,
    tau: float,
    seq_len: int,
    batch: int,
    num_states: int,
    hidden_size: int,
    input_size: int,
    training: bool,
    offs: tuple,     # row offsets: (w_px, b_px, w_ih, w_hh, b_g, w_fc_h, gumbel)
):
    f32 = jnp.float32
    N, T, K, H, D = batch, seq_len, num_states, hidden_size, input_size
    o_wpx, o_bpx, o_wih, o_whh, o_bg, o_wfch, o_gum = offs

    hidden = hidden_ref[...].astype(f32)                          # [N, D]

    # ---- predictors + loop-invariant half of fc as ONE matmul --------------
    #   cols 0:K   -> w_pred           (predictors)
    #   cols K:2K  -> w_fc[H:, :]      (the `hidden` half of the fc layer)
    w_px = slab_ref[o_wpx:o_wpx + D, 0:2 * K]                     # [D, 2K]
    b_px = slab_ref[o_bpx:o_bpx + 1, 0:2 * K]                     # [1, 2K]
    px = jnp.dot(hidden, w_px, preferred_element_type=f32) + b_px
    preds = px[:, 0:K]                                            # [N, K]
    logits_x = px[:, K:2 * K]                                     # [N, K]

    # ---- LSTM input projection hoisted out of the recurrence ---------------
    w_ih = slab_ref[o_wih:o_wih + K, 0:4 * H]                     # [K, 4H]
    b_g = slab_ref[o_bg:o_bg + 1, 0:4 * H]                        # [1, 4H]
    hist = histx_ref[...].astype(f32)                             # [T*N, K]
    gates_x = jnp.dot(hist, w_ih, preferred_element_type=f32) + b_g   # [T*N,4H]

    # ---- LSTM recurrence: only h @ w_hh + nonlinearities per step ----------
    w_hh = slab_ref[o_whh:o_whh + H, 0:4 * H]                     # [H, 4H]
    h = jnp.zeros((N, H), f32)
    c = jnp.zeros((N, H), f32)
    for t in range(T):                                            # static, small T
        gates = gates_x[t * N:(t + 1) * N, :] + jnp.dot(
            h, w_hh, preferred_element_type=f32)                  # [N, 4H]
        # gate columns were reordered in the wrapper to (i, f, o, g):
        sg = jax.nn.sigmoid(gates)        # single EUP pass over the whole vreg
        i_g = sg[:, 0 * H:1 * H]
        f_g = sg[:, 1 * H:2 * H]
        o_g = sg[:, 2 * H:3 * H]
        g_g = jnp.tanh(gates[:, 3 * H:4 * H])
        c = f_g * c + i_g * g_g
        h = o_g * jnp.tanh(c)
    # h == router_out[:, -1] (temporal prediction error)

    # ---- fc: logits = h @ w_fc_h + (hidden @ w_fc_x + b_fc) ----------------
    w_fch = slab_ref[o_wfch:o_wfch + H, 0:K]                      # [H, K]
    logits = jnp.dot(h, w_fch, preferred_element_type=f32) + logits_x

    # ---- Gumbel-softmax (hard=False) ---------------------------------------
    gumbel = slab_ref[o_gum:o_gum + N, 0:K]                       # [N, K]
    z = (logits + gumbel) / tau
    z = z - jnp.max(z, axis=-1, keepdims=True)
    e = jnp.exp(z)
    prob = e * pl.reciprocal(jnp.sum(e, axis=-1, keepdims=True), approx=False)

    # ---- final prediction ---------------------------------------------------
    if training:
        final = jnp.sum(preds * prob, axis=-1, keepdims=True)     # soft mixture
    else:
        # eval: hard routing preds[n, argmax(prob[n])] (first-max tie-break)
        lane = jax.lax.broadcasted_iota(jnp.int32, prob.shape, 1)
        mx = jnp.max(prob, axis=-1, keepdims=True)
        first = jnp.min(jnp.where(prob >= mx, lane, K), axis=-1, keepdims=True)
        final = jnp.sum(preds * (lane == first).astype(f32), axis=-1,
                        keepdims=True)

    # ---- single packed, lane-contiguous store -------------------------------
    out_ref[...] = jnp.concatenate([preds, prob, final], axis=-1).astype(
        out_ref.dtype)


# ----------------------------------------------------------------------------
# Wrapper (layout plumbing done in plain JAX; kernel sees 3 inputs, 1 output)
# ----------------------------------------------------------------------------
def _reorder_gates(w):
    """Reorder gate columns (i, f, g, o) -> (i, f, o, g) along last axis."""
    H = w.shape[-1] // 4
    i, f, g, o = (w[..., 0:H], w[..., H:2 * H],
                  w[..., 2 * H:3 * H], w[..., 3 * H:4 * H])
    return jnp.concatenate([i, f, o, g], axis=-1)


def _pad_block(arr, width):
    r, c = arr.shape
    return jnp.pad(arr.astype(jnp.float32),
                   ((0, _round_up(r, 8) - r), (0, width - c)))


def tra_forward(hidden, hist_loss, params, gumbel_noise, *, tau=1.0,
                training=True):
    N, D = hidden.shape
    _, T, K = hist_loss.shape
    H = params["w_hh"].shape[0]

    # hist_loss -> time-major, flattened: per-step reads become sublane-aligned
    # row blocks and the input projection becomes a single matmul.
    histx = jnp.transpose(hist_loss, (1, 0, 2)).reshape(T * N, K)

    # Gate reorder, combined bias, fc split, and one packed parameter slab.
    w_ih = _reorder_gates(params["w_ih"])
    w_hh = _reorder_gates(params["w_hh"])
    b_g = _reorder_gates(params["b_ih"] + params["b_hh"])
    w_fc_h = params["w_fc"][:H, :]
    w_fc_x = params["w_fc"][H:, :]
    w_px = jnp.concatenate([params["w_pred"], w_fc_x], axis=-1)    # [D, 2K]
    b_px = jnp.concatenate([params["b_pred"], params["b_fc"]], axis=-1)

    width = max(2 * K, 4 * H, K)
    pieces = [("w_px", w_px), ("b_px", b_px), ("w_ih", w_ih),
              ("w_hh", w_hh), ("b_g", b_g), ("w_fc_h", w_fc_h),
              ("gumbel", gumbel_noise)]
    offsets = {}
    blocks = []
    row = 0
    for name, arr in pieces:
        offsets[name] = row
        blk = _pad_block(arr, width)
        blocks.append(blk)
        row += blk.shape[0]
    slab = jnp.concatenate(blocks, axis=0)                         # [R, width]

    kernel = functools.partial(
        tra_kernel,
        tau=float(tau), seq_len=T, batch=N, num_states=K,
        hidden_size=H, input_size=D, training=bool(training),
        offs=(offsets["w_px"], offsets["b_px"], offsets["w_ih"],
              offsets["w_hh"], offsets["b_g"], offsets["w_fc_h"],
              offsets["gumbel"]),
    )

    vmem = pl.BlockSpec(memory_space=pltpu.MemorySpace.VMEM)
    # NOTE: at production batch sizes, add a grid over N with
    # dimension_semantics=("parallel",) so v7x's two TensorCores split the
    # batch; at N=8 a single ungridded call is optimal.
    out = pl.pallas_call(
        kernel,
        out_shape=jax.ShapeDtypeStruct((N, 2 * K + 1), jnp.float32),
        in_specs=[vmem, vmem, vmem],
        out_specs=vmem,
    )(hidden, histx, slab)

    preds = out[:, 0:K]
    prob = out[:, K:2 * K]
    final_pred = out[:, 2 * K]
    return final_pred, preds, prob


# ----------------------------------------------------------------------------
# Pure-JAX reference (mirrors the PyTorch module, gate order i,f,g,o)
# ----------------------------------------------------------------------------
def tra_reference(hidden, hist_loss, params, gumbel_noise, *, tau=1.0):
    H = params["w_hh"].shape[0]
    N = hidden.shape[0]
    preds = hidden @ params["w_pred"] + params["b_pred"]

    h = jnp.zeros((N, H), jnp.float32)
    c = jnp.zeros((N, H), jnp.float32)
    for t in range(hist_loss.shape[1]):
        x_t = hist_loss[:, t, :]
        gates = (x_t @ params["w_ih"] + params["b_ih"]
                 + h @ params["w_hh"] + params["b_hh"])
        i_g = jax.nn.sigmoid(gates[:, 0 * H:1 * H])
        f_g = jax.nn.sigmoid(gates[:, 1 * H:2 * H])
        g_g = jnp.tanh(gates[:, 2 * H:3 * H])
        o_g = jax.nn.sigmoid(gates[:, 3 * H:4 * H])
        c = f_g * c + i_g * g_g
        h = o_g * jnp.tanh(c)

    cat = jnp.concatenate([h, hidden], axis=-1)
    logits = cat @ params["w_fc"] + params["b_fc"]
    prob = jax.nn.softmax((logits + gumbel_noise) / tau, axis=-1)
    final_pred = jnp.sum(preds * prob, axis=-1)
    return final_pred, preds, prob


# ----------------------------------------------------------------------------
# Main
# ----------------------------------------------------------------------------
if __name__ == "__main__":
    # Small shapes consistent with the module's __init__.
    N = 8          # batch
    D = 16         # input_size
    K = 4          # num_states
    H = 8          # hidden_size (router LSTM)
    T = 8          # history length
    TAU = 1.0

    key = jax.random.PRNGKey(0)
    keys = jax.random.split(key, 12)

    scale = 0.1
    params = {
        "w_pred": scale * jax.random.normal(keys[0], (D, K), jnp.float32),
        "b_pred": scale * jax.random.normal(keys[1], (1, K), jnp.float32),
        # PyTorch LSTM stores weight_ih as [4H, K]; we store transposed [K, 4H]
        # with gate order (i, f, g, o).
        "w_ih": scale * jax.random.normal(keys[2], (K, 4 * H), jnp.float32),
        "w_hh": scale * jax.random.normal(keys[3], (H, 4 * H), jnp.float32),
        "b_ih": scale * jax.random.normal(keys[4], (1, 4 * H), jnp.float32),
        "b_hh": scale * jax.random.normal(keys[5], (1, 4 * H), jnp.float32),
        "w_fc": scale * jax.random.normal(keys[6], (H + D, K), jnp.float32),
        "b_fc": scale * jax.random.normal(keys[7], (1, K), jnp.float32),
    }

    hidden = jax.random.normal(keys[8], (N, D), jnp.float32)
    hist_loss = jax.random.normal(keys[9], (N, T, K), jnp.float32)

    # Gumbel(0,1) noise sampled outside the kernel (deterministic).
    u = jax.random.uniform(
        keys[10], (N, K), jnp.float32, minval=1e-6, maxval=1.0 - 1e-6
    )
    gumbel_noise = -jnp.log(-jnp.log(u))

    final_pred, preds, prob = tra_forward(
        hidden, hist_loss, params, gumbel_noise, tau=TAU, training=True
    )
    jax.block_until_ready((final_pred, preds, prob))

    ref_final, ref_preds, ref_prob = tra_reference(
        hidden, hist_loss, params, gumbel_noise, tau=TAU
    )

    assert final_pred.shape == (N,)
    assert preds.shape == (N, K)
    assert prob.shape == (N, K)
    assert jnp.allclose(preds, ref_preds, atol=1e-5), "preds mismatch"
    assert jnp.allclose(prob, ref_prob, atol=1e-5), "prob mismatch"
    assert jnp.allclose(final_pred, ref_final, atol=1e-5), "final_pred mismatch"

    print("KERNEL_OK")
</pallas_src>

<mosaic_0001>
module attributes {stable_mosaic.version = 11 : i64} {
  func.func @tra_kernel(%arg0: memref<8x16xf32, #tpu.memory_space<vmem>>, %arg1: memref<64x4xf32, #tpu.memory_space<vmem>>, %arg2: memref<64x32xf32, #tpu.memory_space<vmem>>, %arg3: memref<8x9xf32, #tpu.memory_space<vmem>>) attributes {dimension_semantics = [], scalar_prefetch = 0 : i64, scratch_operands = 0 : i64, tpu.core_type = #tpu.core_type<tc>} {
    %c0 = arith.constant 0 : index
    %c0_0 = arith.constant 0 : index
    %0 = vector.load %arg0[%c0, %c0_0] : memref<8x16xf32, #tpu.memory_space<vmem>>, vector<8x16xf32>
    %c0_1 = arith.constant 0 : index
    %c0_2 = arith.constant 0 : index
    %1 = vector.load %arg2[%c0_1, %c0_2] : memref<64x32xf32, #tpu.memory_space<vmem>>, vector<16x8xf32>
    %c16 = arith.constant 16 : index
    %c0_3 = arith.constant 0 : index
    %2 = vector.load %arg2[%c16, %c0_3] : memref<64x32xf32, #tpu.memory_space<vmem>>, vector<1x8xf32>
    %cst = arith.constant dense<0.000000e+00> : vector<8x8xf32>
    %3 = tpu.matmul %0, %1, %cst {dimension_numbers = #tpu.dot_dimension_numbers<[1], [0], [0], [1], [0, 0, 1, 1], [], []>} : vector<8x16xf32>, vector<16x8xf32>, vector<8x8xf32> -> vector<8x8xf32>
    %4 = vector.broadcast %2 : vector<1x8xf32> to vector<8x8xf32>
    %5 = arith.addf %3, %4 : vector<8x8xf32>
    %6 = vector.extract_strided_slice %5 {offsets = [0, 0], sizes = [8, 4], strides = [1, 1]} : vector<8x8xf32> to vector<8x4xf32>
    %7 = vector.extract_strided_slice %5 {offsets = [0, 4], sizes = [8, 4], strides = [1, 1]} : vector<8x8xf32> to vector<8x4xf32>
    %c24 = arith.constant 24 : index
    %c0_4 = arith.constant 0 : index
    %8 = vector.load %arg2[%c24, %c0_4] : memref<64x32xf32, #tpu.memory_space<vmem>>, vector<4x32xf32>
    %c40 = arith.constant 40 : index
    %c0_5 = arith.constant 0 : index
    %9 = vector.load %arg2[%c40, %c0_5] : memref<64x32xf32, #tpu.memory_space<vmem>>, vector<1x32xf32>
    %c0_6 = arith.constant 0 : index
    %c0_7 = arith.constant 0 : index
    %10 = vector.load %arg1[%c0_6, %c0_7] : memref<64x4xf32, #tpu.memory_space<vmem>>, vector<64x4xf32>
    %cst_8 = arith.constant dense<0.000000e+00> : vector<64x32xf32>
    %11 = tpu.matmul %10, %8, %cst_8 {dimension_numbers = #tpu.dot_dimension_numbers<[1], [0], [0], [1], [0, 0, 1, 1], [], []>} : vector<64x4xf32>, vector<4x32xf32>, vector<64x32xf32> -> vector<64x32xf32>
    %12 = vector.broadcast %9 : vector<1x32xf32> to vector<64x32xf32>
    %13 = arith.addf %11, %12 : vector<64x32xf32>
    %c32 = arith.constant 32 : index
    %c0_9 = arith.constant 0 : index
    %14 = vector.load %arg2[%c32, %c0_9] : memref<64x32xf32, #tpu.memory_space<vmem>>, vector<8x32xf32>
    %cst_10 = arith.constant 0.000000e+00 : f32
    %15 = vector.broadcast %cst_10 : f32 to vector<8x8xf32>
    %cst_11 = arith.constant 0.000000e+00 : f32
    %16 = vector.broadcast %cst_11 : f32 to vector<8x8xf32>
    %17 = vector.extract_strided_slice %13 {offsets = [0, 0], sizes = [8, 32], strides = [1, 1]} : vector<64x32xf32> to vector<8x32xf32>
    %cst_12 = arith.constant dense<0.000000e+00> : vector<8x32xf32>
    %18 = tpu.matmul %15, %14, %cst_12 {dimension_numbers = #tpu.dot_dimension_numbers<[1], [0], [0], [1], [0, 0, 1, 1], [], []>} : vector<8x8xf32>, vector<8x32xf32>, vector<8x32xf32> -> vector<8x32xf32>
    %19 = arith.addf %17, %18 : vector<8x32xf32>
    %20 = arith.negf %19 : vector<8x32xf32>
    %21 = math.exp %20 : vector<8x32xf32>
    %cst_13 = arith.constant 1.000000e+00 : f32
    %22 = vector.broadcast %cst_13 : f32 to vector<8x32xf32>
    %23 = arith.addf %22, %21 : vector<8x32xf32>
    %24 = arith.divf %22, %23 : vector<8x32xf32>
    %25 = vector.extract_strided_slice %24 {offsets = [0, 0], sizes = [8, 8], strides = [1, 1]} : vector<8x32xf32> to vector<8x8xf32>
    %26 = vector.extract_strided_slice %24 {offsets = [0, 8], sizes = [8, 8], strides = [1, 1]} : vector<8x32xf32> to vector<8x8xf32>
    %27 = vector.extract_strided_slice %24 {offsets = [0, 16], sizes = [8, 8], strides = [1, 1]} : vector<8x32xf32> to vector<8x8xf32>
    %28 = vector.extract_strided_slice %19 {offsets = [0, 24], sizes = [8, 8], strides = [1, 1]} : vector<8x32xf32> to vector<8x8xf32>
    %29 = math.tanh %28 : vector<8x8xf32>
    %30 = arith.mulf %26, %16 : vector<8x8xf32>
    %31 = arith.mulf %25, %29 : vector<8x8xf32>
    %32 = arith.addf %30, %31 : vector<8x8xf32>
    %33 = math.tanh %32 : vector<8x8xf32>
    %34 = arith.mulf %27, %33 : vector<8x8xf32>
    %35 = vector.extract_strided_slice %13 {offsets = [8, 0], sizes = [8, 32], strides = [1, 1]} : vector<64x32xf32> to vector<8x32xf32>
    %cst_14 = arith.constant dense<0.000000e+00> : vector<8x32xf32>
    %36 = tpu.matmul %34, %14, %cst_14 {dimension_numbers = #tpu.dot_dimension_numbers<[1], [0], [0], [1], [0, 0, 1, 1], [], []>} : vector<8x8xf32>, vector<8x32xf32>, vector<8x32xf32> -> vector<8x32xf32>
    %37 = arith.addf %35, %36 : vector<8x32xf32>
    %38 = arith.negf %37 : vector<8x32xf32>
    %39 = math.exp %38 : vector<8x32xf32>
    %cst_15 = arith.constant 1.000000e+00 : f32
    %40 = vector.broadcast %cst_15 : f32 to vector<8x32xf32>
    %41 = arith.addf %40, %39 : vector<8x32xf32>
    %42 = arith.divf %40, %41 : vector<8x32xf32>
    %43 = vector.extract_strided_slice %42 {offsets = [0, 0], sizes = [8, 8], strides = [1, 1]} : vector<8x32xf32> to vector<8x8xf32>
    %44 = vector.extract_strided_slice %42 {offsets = [0, 8], sizes = [8, 8], strides = [1, 1]} : vector<8x32xf32> to vector<8x8xf32>
    %45 = vector.extract_strided_slice %42 {offsets = [0, 16], sizes = [8, 8], strides = [1, 1]} : vector<8x32xf32> to vector<8x8xf32>
    %46 = vector.extract_strided_slice %37 {offsets = [0, 24], sizes = [8, 8], strides = [1, 1]} : vector<8x32xf32> to vector<8x8xf32>
    %47 = math.tanh %46 : vector<8x8xf32>
    %48 = arith.mulf %44, %32 : vector<8x8xf32>
    %49 = arith.mulf %43, %47 : vector<8x8xf32>
    %50 = arith.addf %48, %49 : vector<8x8xf32>
    %51 = math.tanh %50 : vector<8x8xf32>
    %52 = arith.mulf %45, %51 : vector<8x8xf32>
    %53 = vector.extract_strided_slice %13 {offsets = [16, 0], sizes = [8, 32], strides = [1, 1]} : vector<64x32xf32> to vector<8x32xf32>
    %cst_16 = arith.constant dense<0.000000e+00> : vector<8x32xf32>
    %54 = tpu.matmul %52, %14, %cst_16 {dimension_numbers = #tpu.dot_dimension_numbers<[1], [0], [0], [1], [0, 0, 1, 1], [], []>} : vector<8x8xf32>, vector<8x32xf32>, vector<8x32xf32> -> vector<8x32xf32>
    %55 = arith.addf %53, %54 : vector<8x32xf32>
    %56 = arith.negf %55 : vector<8x32xf32>
    %57 = math.exp %56 : vector<8x32xf32>
    %cst_17 = arith.constant 1.000000e+00 : f32
    %58 = vector.broadcast %cst_17 : f32 to vector<8x32xf32>
    %59 = arith.addf %58, %57 : vector<8x32xf32>
    %60 = arith.divf %58, %59 : vector<8x32xf32>
    %61 = vector.extract_strided_slice %60 {offsets = [0, 0], sizes = [8, 8], strides = [1, 1]} : vector<8x32xf32> to vector<8x8xf32>
    %62 = vector.extract_strided_slice %60 {offsets = [0, 8], sizes = [8, 8], strides = [1, 1]} : vector<8x32xf32> to vector<8x8xf32>
    %63 = vector.extract_strided_slice %60 {offsets = [0, 16], sizes = [8, 8], strides = [1, 1]} : vector<8x32xf32> to vector<8x8xf32>
    %64 = vector.extract_strided_slice %55 {offsets = [0, 24], sizes = [8, 8], strides = [1, 1]} : vector<8x32xf32> to vector<8x8xf32>
    %65 = math.tanh %64 : vector<8x8xf32>
    %66 = arith.mulf %62, %50 : vector<8x8xf32>
    %67 = arith.mulf %61, %65 : vector<8x8xf32>
    %68 = arith.addf %66, %67 : vector<8x8xf32>
    %69 = math.tanh %68 : vector<8x8xf32>
    %70 = arith.mulf %63, %69 : vector<8x8xf32>
    %71 = vector.extract_strided_slice %13 {offsets = [24, 0], sizes = [8, 32], strides = [1, 1]} : vector<64x32xf32> to vector<8x32xf32>
    %cst_18 = arith.constant dense<0.000000e+00> : vector<8x32xf32>
    %72 = tpu.matmul %70, %14, %cst_18 {dimension_numbers = #tpu.dot_dimension_numbers<[1], [0], [0], [1], [0, 0, 1, 1], [], []>} : vector<8x8xf32>, vector<8x32xf32>, vector<8x32xf32> -> vector<8x32xf32>
    %73 = arith.addf %71, %72 : vector<8x32xf32>
    %74 = arith.negf %73 : vector<8x32xf32>
    %75 = math.exp %74 : vector<8x32xf32>
    %cst_19 = arith.constant 1.000000e+00 : f32
    %76 = vector.broadcast %cst_19 : f32 to vector<8x32xf32>
    %77 = arith.addf %76, %75 : vector<8x32xf32>
    %78 = arith.divf %76, %77 : vector<8x32xf32>
    %79 = vector.extract_strided_slice %78 {offsets = [0, 0], sizes = [8, 8], strides = [1, 1]} : vector<8x32xf32> to vector<8x8xf32>
    %80 = vector.extract_strided_slice %78 {offsets = [0, 8], sizes = [8, 8], strides = [1, 1]} : vector<8x32xf32> to vector<8x8xf32>
    %81 = vector.extract_strided_slice %78 {offsets = [0, 16], sizes = [8, 8], strides = [1, 1]} : vector<8x32xf32> to vector<8x8xf32>
    %82 = vector.extract_strided_slice %73 {offsets = [0, 24], sizes = [8, 8], strides = [1, 1]} : vector<8x32xf32> to vector<8x8xf32>
    %83 = math.tanh %82 : vector<8x8xf32>
    %84 = arith.mulf %80, %68 : vector<8x8xf32>
    %85 = arith.mulf %79, %83 : vector<8x8xf32>
    %86 = arith.addf %84, %85 : vector<8x8xf32>
    %87 = math.tanh %86 : vector<8x8xf32>
    %88 = arith.mulf %81, %87 : vector<8x8xf32>
    %89 = vector.extract_strided_slice %13 {offsets = [32, 0], sizes = [8, 32], strides = [1, 1]} : vector<64x32xf32> to vector<8x32xf32>
    %cst_20 = arith.constant dense<0.000000e+00> : vector<8x32xf32>
    %90 = tpu.matmul %88, %14, %cst_20 {dimension_numbers = #tpu.dot_dimension_numbers<[1], [0], [0], [1], [0, 0, 1, 1], [], []>} : vector<8x8xf32>, vector<8x32xf32>, vector<8x32xf32> -> vector<8x32xf32>
    %91 = arith.addf %89, %90 : vector<8x32xf32>
    %92 = arith.negf %91 : vector<8x32xf32>
    %93 = math.exp %92 : vector<8x32xf32>
    %cst_21 = arith.constant 1.000000e+00 : f32
    %94 = vector.broadcast %cst_21 : f32 to vector<8x32xf32>
    %95 = arith.addf %94, %93 : vector<8x32xf32>
    %96 = arith.divf %94, %95 : vector<8x32xf32>
    %97 = vector.extract_strided_slice %96 {offsets = [0, 0], sizes = [8, 8], strides = [1, 1]} : vector<8x32xf32> to vector<8x8xf32>
    %98 = vector.extract_strided_slice %96 {offsets = [0, 8], sizes = [8, 8], strides = [1, 1]} : vector<8x32xf32> to vector<8x8xf32>
    %99 = vector.extract_strided_slice %96 {offsets = [0, 16], sizes = [8, 8], strides = [1, 1]} : vector<8x32xf32> to vector<8x8xf32>
    %100 = vector.extract_strided_slice %91 {offsets = [0, 24], sizes = [8, 8], strides = [1, 1]} : vector<8x32xf32> to vector<8x8xf32>
    %101 = math.tanh %100 : vector<8x8xf32>
    %102 = arith.mulf %98, %86 : vector<8x8xf32>
    %103 = arith.mulf %97, %101 : vector<8x8xf32>
    %104 = arith.addf %102, %103 : vector<8x8xf32>
    %105 = math.tanh %104 : vector<8x8xf32>
    %106 = arith.mulf %99, %105 : vector<8x8xf32>
    %107 = vector.extract_strided_slice %13 {offsets = [40, 0], sizes = [8, 32], strides = [1, 1]} : vector<64x32xf32> to vector<8x32xf32>
    %cst_22 = arith.constant dense<0.000000e+00> : vector<8x32xf32>
    %108 = tpu.matmul %106, %14, %cst_22 {dimension_numbers = #tpu.dot_dimension_numbers<[1], [0], [0], [1], [0, 0, 1, 1], [], []>} : vector<8x8xf32>, vector<8x32xf32>, vector<8x32xf32> -> vector<8x32xf32>
    %109 = arith.addf %107, %108 : vector<8x32xf32>
    %110 = arith.negf %109 : vector<8x32xf32>
    %111 = math.exp %110 : vector<8x32xf32>
    %cst_23 = arith.constant 1.000000e+00 : f32
    %112 = vector.broadcast %cst_23 : f32 to vector<8x32xf32>
    %113 = arith.addf %112, %111 : vector<8x32xf32>
    %114 = arith.divf %112, %113 : vector<8x32xf32>
    %115 = vector.extract_strided_slice %114 {offsets = [0, 0], sizes = [8, 8], strides = [1, 1]} : vector<8x32xf32> to vector<8x8xf32>
    %116 = vector.extract_strided_slice %114 {offsets = [0, 8], sizes = [8, 8], strides = [1, 1]} : vector<8x32xf32> to vector<8x8xf32>
    %117 = vector.extract_strided_slice %114 {offsets = [0, 16], sizes = [8, 8], strides = [1, 1]} : vector<8x32xf32> to vector<8x8xf32>
    %118 = vector.extract_strided_slice %109 {offsets = [0, 24], sizes = [8, 8], strides = [1, 1]} : vector<8x32xf32> to vector<8x8xf32>
    %119 = math.tanh %118 : vector<8x8xf32>
    %120 = arith.mulf %116, %104 : vector<8x8xf32>
    %121 = arith.mulf %115, %119 : vector<8x8xf32>
    %122 = arith.addf %120, %121 : vector<8x8xf32>
    %123 = math.tanh %122 : vector<8x8xf32>
    %124 = arith.mulf %117, %123 : vector<8x8xf32>
    %125 = vector.extract_strided_slice %13 {offsets = [48, 0], sizes = [8, 32], strides = [1, 1]} : vector<64x32xf32> to vector<8x32xf32>
    %cst_24 = arith.constant dense<0.000000e+00> : vector<8x32xf32>
    %126 = tpu.matmul %124, %14, %cst_24 {dimension_numbers = #tpu.dot_dimension_numbers<[1], [0], [0], [1], [0, 0, 1, 1], [], []>} : vector<8x8xf32>, vector<8x32xf32>, vector<8x32xf32> -> vector<8x32xf32>
    %127 = arith.addf %125, %126 : vector<8x32xf32>
    %128 = arith.negf %127 : vector<8x32xf32>
    %129 = math.exp %128 : vector<8x32xf32>
    %cst_25 = arith.constant 1.000000e+00 : f32
    %130 = vector.broadcast %cst_25 : f32 to vector<8x32xf32>
    %131 = arith.addf %130, %129 : vector<8x32xf32>
    %132 = arith.divf %130, %131 : vector<8x32xf32>
    %133 = vector.extract_strided_slice %132 {offsets = [0, 0], sizes = [8, 8], strides = [1, 1]} : vector<8x32xf32> to vector<8x8xf32>
    %134 = vector.extract_strided_slice %132 {offsets = [0, 8], sizes = [8, 8], strides = [1, 1]} : vector<8x32xf32> to vector<8x8xf32>
    %135 = vector.extract_strided_slice %132 {offsets = [0, 16], sizes = [8, 8], strides = [1, 1]} : vector<8x32xf32> to vector<8x8xf32>
    %136 = vector.extract_strided_slice %127 {offsets = [0, 24], sizes = [8, 8], strides = [1, 1]} : vector<8x32xf32> to vector<8x8xf32>
    %137 = math.tanh %136 : vector<8x8xf32>
    %138 = arith.mulf %134, %122 : vector<8x8xf32>
    %139 = arith.mulf %133, %137 : vector<8x8xf32>
    %140 = arith.addf %138, %139 : vector<8x8xf32>
    %141 = math.tanh %140 : vector<8x8xf32>
    %142 = arith.mulf %135, %141 : vector<8x8xf32>
    %143 = vector.extract_strided_slice %13 {offsets = [56, 0], sizes = [8, 32], strides = [1, 1]} : vector<64x32xf32> to vector<8x32xf32>
    %cst_26 = arith.constant dense<0.000000e+00> : vector<8x32xf32>
    %144 = tpu.matmul %142, %14, %cst_26 {dimension_numbers = #tpu.dot_dimension_numbers<[1], [0], [0], [1], [0, 0, 1, 1], [], []>} : vector<8x8xf32>, vector<8x32xf32>, vector<8x32xf32> -> vector<8x32xf32>
    %145 = arith.addf %143, %144 : vector<8x32xf32>
    %146 = arith.negf %145 : vector<8x32xf32>
    %147 = math.exp %146 : vector<8x32xf32>
    %cst_27 = arith.constant 1.000000e+00 : f32
    %148 = vector.broadcast %cst_27 : f32 to vector<8x32xf32>
    %149 = arith.addf %148, %147 : vector<8x32xf32>
    %150 = arith.divf %148, %149 : vector<8x32xf32>
    %151 = vector.extract_strided_slice %150 {offsets = [0, 0], sizes = [8, 8], strides = [1, 1]} : vector<8x32xf32> to vector<8x8xf32>
    %152 = vector.extract_strided_slice %150 {offsets = [0, 8], sizes = [8, 8], strides = [1, 1]} : vector<8x32xf32> to vector<8x8xf32>
    %153 = vector.extract_strided_slice %150 {offsets = [0, 16], sizes = [8, 8], strides = [1, 1]} : vector<8x32xf32> to vector<8x8xf32>
    %154 = vector.extract_strided_slice %145 {offsets = [0, 24], sizes = [8, 8], strides = [1, 1]} : vector<8x32xf32> to vector<8x8xf32>
    %155 = math.tanh %154 : vector<8x8xf32>
    %156 = arith.mulf %152, %140 : vector<8x8xf32>
    %157 = arith.mulf %151, %155 : vector<8x8xf32>
    %158 = arith.addf %156, %157 : vector<8x8xf32>
    %159 = math.tanh %158 : vector<8x8xf32>
    %160 = arith.mulf %153, %159 : vector<8x8xf32>
    %c48 = arith.constant 48 : index
    %c0_28 = arith.constant 0 : index
    %161 = vector.load %arg2[%c48, %c0_28] : memref<64x32xf32, #tpu.memory_space<vmem>>, vector<8x4xf32>
    %cst_29 = arith.constant dense<0.000000e+00> : vector<8x4xf32>
    %162 = tpu.matmul %160, %161, %cst_29 {dimension_numbers = #tpu.dot_dimension_numbers<[1], [0], [0], [1], [0, 0, 1, 1], [], []>} : vector<8x8xf32>, vector<8x4xf32>, vector<8x4xf32> -> vector<8x4xf32>
    %163 = arith.addf %162, %7 : vector<8x4xf32>
    %c56 = arith.constant 56 : index
    %c0_30 = arith.constant 0 : index
    %164 = vector.load %arg2[%c56, %c0_30] : memref<64x32xf32, #tpu.memory_space<vmem>>, vector<8x4xf32>
    %165 = arith.addf %163, %164 : vector<8x4xf32>
    %cst_31 = arith.constant 1.000000e+00 : f32
    %166 = vector.broadcast %cst_31 : f32 to vector<8x4xf32>
    %167 = arith.divf %165, %166 : vector<8x4xf32>
    %cst_32 = arith.constant dense<0xFF800000> : vector<8xf32>
    %168 = vector.multi_reduction <maximumf>, %167, %cst_32 [1] : vector<8x4xf32> to vector<8xf32>
    %169 = vector.shape_cast %168 : vector<8xf32> to vector<8x1xf32>
    %170 = vector.broadcast %169 : vector<8x1xf32> to vector<8x4xf32>
    %171 = arith.subf %167, %170 : vector<8x4xf32>
    %172 = math.exp %171 : vector<8x4xf32>
    %cst_33 = arith.constant dense<0.000000e+00> : vector<8xf32>
    %173 = vector.multi_reduction <add>, %172, %cst_33 [1] : vector<8x4xf32> to vector<8xf32>
    %174 = vector.shape_cast %173 : vector<8xf32> to vector<8x1xf32>
    %175 = tpu.reciprocal %174 : vector<8x1xf32> -> vector<8x1xf32>
    %176 = vector.broadcast %175 : vector<8x1xf32> to vector<8x4xf32>
    %177 = arith.mulf %172, %176 : vector<8x4xf32>
    %178 = arith.mulf %6, %177 : vector<8x4xf32>
    %cst_34 = arith.constant dense<0.000000e+00> : vector<8xf32>
    %179 = vector.multi_reduction <add>, %178, %cst_34 [1] : vector<8x4xf32> to vector<8xf32>
    %180 = vector.shape_cast %179 : vector<8xf32> to vector<8x1xf32>
    %181 = tpu.concatenate %6, %177, %180 in 1 : vector<8x4xf32>, vector<8x4xf32>, vector<8x1xf32> -> vector<8x9xf32>
    %c0_35 = arith.constant 0 : index
    %c0_36 = arith.constant 0 : index
    %182 = vector.load %arg3[%c0_35, %c0_36] : memref<8x9xf32, #tpu.memory_space<vmem>>, vector<8x9xf32>
    tpu.vector_store %arg3[%c0_35, %c0_36], %181 {strides = array<i32>} : memref<8x9xf32, #tpu.memory_space<vmem>>, vector<8x9xf32>,
    return
  }
}

</mosaic_0001>

<llo_original>
// kernel: tpu_custom_call.1
$region0: #{tpu_custom_call.1}
  #allocation0 [shape = 'u32[]', space=smem, size = 0x4, offset = 0x4, fixed_abs, tag = 'smem constant byte address 0x4 - core index']
  #allocation1 [shape = 'u32[144,128]{1,0:T(1,128)}', space=vmem, size = 0x12000, scoped, tag = 'internal scratch']
  %s0 = inlined_call_operand.vmem [shape: f32[8,16], index: 0, kind: input, shape index: {}]
  %s1 = inlined_call_operand.vmem [shape: f32[64,4], index: 1, kind: input, shape index: {}]
  %s2 = inlined_call_operand.vmem [shape: f32[64,32], index: 2, kind: input, shape index: {}]
  %s3 = inlined_call_operand.hbm [shape: f32[8,9], index: 3, kind: output, shape index: {}]
  %s4 = sld [smem:[#allocation0]]
  $region22: #{tpu_custom_call.1} parent=0
    _
  %s6 = ssub.s32 1, %s4
  %s7 = scalar_select 0, %s6, %s4
  $region1: #{tpu_custom_call.1} parent=0
    #allocation2 [shape = 'u8[4096]{0}', space=vmem, size = 0x1000, scoped, tag = 'output window, operand 0, single buffered']
    #allocation3 [shape = 's32[1]{0}', space=sflag, size = 0x4, scoped, tag = 'scoped memory for tpu_custom_call.1']
    %8 = vsyncpa [#allocation3], 0
    // Predicated region
    $region2: #{tpu_custom_call.1} parent=1 // pred_check
      _
    $region3: #{tpu_custom_call.1} parent=1 // pred_check_branch
      %10 = sbr.rel (0) target = $region5
    $region4: #{tpu_custom_call.1} parent=1 // pred_region
      _
    $region5: #{tpu_custom_call.1} parent=1 // pred_fallthru
      _
    // Predicated region
    $region6: #{tpu_custom_call.1} parent=1 // pred_check
      _
    $region7: #{tpu_custom_call.1} parent=1 // pred_check_branch
      %12 = sbr.rel (0) target = $region9
    $region8: #{tpu_custom_call.1} parent=1 // pred_region
      _
    $region9: #{tpu_custom_call.1} parent=1 // pred_fallthru
      _
    // Predicated region
    $region10: #{tpu_custom_call.1} parent=1 // pred_check
      _
    $region11: #{tpu_custom_call.1} parent=1 // pred_check_branch
      %14 = sbr.rel (0) target = $region13
    $region12: #{tpu_custom_call.1} parent=1 // pred_region
      _
    $region13: #{tpu_custom_call.1} parent=1 // pred_fallthru
      _
    %v15 = vld [vmem:[%s0] sm:$0xff]
    %v16 = vld [vmem:[%s2] sm:$0xff]
    %v17 = vld [vmem:[%s2 + $0x8] sm:$0xff]
    %v18 = vld [vmem:[%s2 + $0x10] sm:$0x1]
    %v19 = vlaneseq
    %v20 = vshrl.u32 %v19, 7
    %v21 = vsub.s32 0, %v20
    %v22 = vrot.slane %v18, %v21
    %vm23 = vcmask 130048
    %v25 = vsel %vm23, %v15, 0
    %27 = vmatprep.subr.mxu0 0.0
    %28 = vmatpush1.msra.mxu0 %v16
    %29 = vmatprep.subr.mxu0 0.0
    %30 = vmatpush1.msra.mxu0 %v17
    %31 = vmatprep.subr.mxu0 0.0
    %32 = vmatpush1.msra.mxu0 0.0
    %33 = vmatprep.subr.mxu0 0.0
    %34 = vmatpush1.msra.mxu0 0.0
    %35 = vmatprep.subr.mxu0 0.0
    %36 = vmatpush1.msra.mxu0 0.0
    %37 = vmatprep.subr.mxu0 0.0
    %38 = vmatpush1.msra.mxu0 0.0
    %39 = vmatprep.subr.mxu0 0.0
    %40 = vmatpush1.msra.mxu0 0.0
    %41 = vmatprep.subr.mxu0 0.0
    %42 = vmatpush1.msra.mxu0 0.0
    %43 = vmatprep.subr.mxu0 0.0
    %44 = vmatpush1.msra.mxu0 0.0
    %45 = vmatprep.subr.mxu0 0.0
    %46 = vmatpush1.msra.mxu0 0.0
    %47 = vmatprep.subr.mxu0 0.0
    %48 = vmatpush1.msra.mxu0 0.0
    %49 = vmatprep.subr.mxu0 0.0
    %50 = vmatpush1.msra.mxu0 0.0
    %51 = vmatprep.subr.mxu0 0.0
    %52 = vmatpush1.msra.mxu0 0.0
    %53 = vmatprep.subr.mxu0 0.0
    %54 = vmatpush1.msra.mxu0 0.0
    %55 = vmatprep.subr.mxu0 0.0
    %56 = vmatpush1.msra.mxu0 0.0
    %57 = vmatprep.subr.mxu0 0.0
    %58 = vmatpush1.msra.mxu0 0.0
    %59 = vmatprep.subr.mxu0 0.0
    %60 = vmatpush1.msra.mxu0 0.0
    %61 = vmatprep.subr.mxu0 0.0
    %62 = vmatpush1.msra.mxu0 0.0
    %63 = vmatprep.subr.mxu0 0.0
    %64 = vmatpush1.msra.mxu0 0.0
    %65 = vmatprep.subr.mxu0 0.0
    %66 = vmatpush1.msra.mxu0 0.0
    %67 = vmatprep.subr.mxu0 0.0
    %68 = vmatpush1.msra.mxu0 0.0
    %69 = vmatprep.subr.mxu0 0.0
    %70 = vmatpush1.msra.mxu0 0.0
    %71 = vmatprep.subr.mxu0 0.0
    %72 = vmatpush1.msra.mxu0 0.0
    %73 = vmatprep.subr.mxu0 0.0
    %74 = vmatpush1.msra.mxu0 0.0
    %75 = vmatprep.subr.mxu0 0.0
    %76 = vmatpush1.msra.mxu0 0.0
    %77 = vmatprep.subr.mxu0 0.0
    %78 = vmatpush1.msra.mxu0 0.0
    %79 = vmatprep.subr.mxu0 0.0
    %80 = vmatpush1.msra.mxu0 0.0
    %81 = vmatprep.subr.mxu0 0.0
    %82 = vmatpush1.msra.mxu0 0.0
    %83 = vmatprep.subr.mxu0 0.0
    %84 = vmatpush1.msra.mxu0 0.0
    %85 = vmatprep.subr.mxu0 0.0
    %86 = vmatpush1.msra.mxu0 0.0
    %87 = vmatprep.subr.mxu0 0.0
    %88 = vmatpush1.msra.mxu0 0.0
    %89 = vmatprep.subr.mxu0 0.0
    %90 = vmatpush1.msra.mxu0 0.0
    %91 = vmatprep.mubr.f32.mxu0 0.0
    %92 = vmatmul.mubr.f32.gmra.mrb[0].mxu0 %v25
    %v93 = vpop.f32.mrb[0].mxu0
    %v94 = vadd.f32 %v22, %v93
    %v95 = vpop.f32.mrb[0].mxu0
    %96 = vdwg.mxu0
    %v97 = vld [vmem:[%s2 + $0x18] sm:$0xf]
    %v98 = vld [vmem:[%s2 + $0x28] sm:$0x1]
    %v99 = vld [vmem:[%s1] sm:$0xff]
    %v100 = vld [vmem:[%s1 + $0x8] sm:$0xff]
    %v101 = vld [vmem:[%s1 + $0x10] sm:$0xff]
    %v102 = vld [vmem:[%s1 + $0x18] sm:$0xff]
    %v103 = vld [vmem:[%s1 + $0x20] sm:$0xff]
    %v104 = vld [vmem:[%s1 + $0x28] sm:$0xff]
    %v105 = vld [vmem:[%s1 + $0x30] sm:$0xff]
    %v106 = vld [vmem:[%s1 + $0x38] sm:$0xff]
    %v107 = vlaneseq
    %v108 = vshrl.u32 %v107, 7
    %v109 = vsub.s32 0, %v108
    %v110 = vrot.slane %v98, %v109
    %vm111 = vcmask 31744
    %v113 = vsel %vm111, %v99, 0
    %v116 = vsel %vm111, %v100, 0
    %v119 = vsel %vm111, %v101, 0
    %v122 = vsel %vm111, %v102, 0
    %v125 = vsel %vm111, %v103, 0
    %v128 = vsel %vm111, %v104, 0
    %v131 = vsel %vm111, %v105, 0
    %v134 = vsel %vm111, %v106, 0
    %vm136 = vcmask 1043456
    %v138 = vsel %vm136, %v97, 0
    %140 = vmatprep.subr.mxu0 0.0
    %141 = vmatpush1.msra.mxu0 %v138
    %142 = vmatprep.subr.mxu0 0.0
    %143 = vmatpush1.msra.mxu0 0.0
    %144 = vmatprep.subr.mxu0 0.0
    %145 = vmatpush1.msra.mxu0 0.0
    %146 = vmatprep.subr.mxu0 0.0
    %147 = vmatpush1.msra.mxu0 0.0
    %148 = vmatprep.subr.mxu0 0.0
    %149 = vmatpush1.msra.mxu0 0.0
    %150 = vmatprep.subr.mxu0 0.0
    %151 = vmatpush1.msra.mxu0 0.0
    %152 = vmatprep.subr.mxu0 0.0
    %153 = vmatpush1.msra.mxu0 0.0
    %154 = vmatprep.subr.mxu0 0.0
    %155 = vmatpush1.msra.mxu0 0.0
    %156 = vmatprep.subr.mxu0 0.0
    %157 = vmatpush1.msra.mxu0 0.0
    %158 = vmatprep.subr.mxu0 0.0
    %159 = vmatpush1.msra.mxu0 0.0
    %160 = vmatprep.subr.mxu0 0.0
    %161 = vmatpush1.msra.mxu0 0.0
    %162 = vmatprep.subr.mxu0 0.0
    %163 = vmatpush1.msra.mxu0 0.0
    %164 = vmatprep.subr.mxu0 0.0
    %165 = vmatpush1.msra.mxu0 0.0
    %166 = vmatprep.subr.mxu0 0.0
    %167 = vmatpush1.msra.mxu0 0.0
    %168 = vmatprep.subr.mxu0 0.0
    %169 = vmatpush1.msra.mxu0 0.0
    %170 = vmatprep.subr.mxu0 0.0
    %171 = vmatpush1.msra.mxu0 0.0
    %172 = vmatprep.subr.mxu0 0.0
    %173 = vmatpush1.msra.mxu0 0.0
    %174 = vmatprep.subr.mxu0 0.0
    %175 = vmatpush1.msra.mxu0 0.0
    %176 = vmatprep.subr.mxu0 0.0
    %177 = vmatpush1.msra.mxu0 0.0
    %178 = vmatprep.subr.mxu0 0.0
    %179 = vmatpush1.msra.mxu0 0.0
    %180 = vmatprep.subr.mxu0 0.0
    %181 = vmatpush1.msra.mxu0 0.0
    %182 = vmatprep.subr.mxu0 0.0
    %183 = vmatpush1.msra.mxu0 0.0
    %184 = vmatprep.subr.mxu0 0.0
    %185 = vmatpush1.msra.mxu0 0.0
    %186 = vmatprep.subr.mxu0 0.0
    %187 = vmatpush1.msra.mxu0 0.0
    %188 = vmatprep.subr.mxu0 0.0
    %189 = vmatpush1.msra.mxu0 0.0
    %190 = vmatprep.subr.mxu0 0.0
    %191 = vmatpush1.msra.mxu0 0.0
    %192 = vmatprep.subr.mxu0 0.0
    %193 = vmatpush1.msra.mxu0 0.0
    %194 = vmatprep.subr.mxu0 0.0
    %195 = vmatpush1.msra.mxu0 0.0
    %196 = vmatprep.subr.mxu0 0.0
    %197 = vmatpush1.msra.mxu0 0.0
    %198 = vmatprep.subr.mxu0 0.0
    %199 = vmatpush1.msra.mxu0 0.0
    %200 = vmatprep.subr.mxu0 0.0
    %201 = vmatpush1.msra.mxu0 0.0
    %202 = vmatprep.subr.mxu0 0.0
    %203 = vmatpush1.msra.mxu0 0.0
    %204 = vmatprep.mubr.f32.mxu0 0.0
    %205 = vmatmul.mubr.f32.gmra.mrb[0].mxu0 %v113
    %v206 = vpop.f32.mrb[0].mxu0
    %v207 = vadd.f32 %v110, %v206
    %v208 = vpop.f32.mrb[0].mxu0
    %209 = vmatprep.mubr.f32.mxu0 0.0
    %210 = vmatmul.mubr.f32.gmra.mrb[0].mxu0 %v116
    %v211 = vpop.f32.mrb[0].mxu0
    %v212 = vadd.f32 %v110, %v211
    %v213 = vpop.f32.mrb[0].mxu0
    %214 = vmatprep.mubr.f32.mxu0 0.0
    %215 = vmatmul.mubr.f32.gmra.mrb[0].mxu0 %v119
    %v216 = vpop.f32.mrb[0].mxu0
    %v217 = vadd.f32 %v110, %v216
    %v218 = vpop.f32.mrb[0].mxu0
    %219 = vmatprep.mubr.f32.mxu0 0.0
    %220 = vmatmul.mubr.f32.gmra.mrb[0].mxu0 %v122
    %v221 = vpop.f32.mrb[0].mxu0
    %v222 = vadd.f32 %v110, %v221
    %v223 = vpop.f32.mrb[0].mxu0
    %224 = vmatprep.mubr.f32.mxu0 0.0
    %225 = vmatmul.mubr.f32.gmra.mrb[0].mxu0 %v125
    %v226 = vpop.f32.mrb[0].mxu0
    %v227 = vadd.f32 %v110, %v226
    %v228 = vpop.f32.mrb[0].mxu0
    %229 = vmatprep.mubr.f32.mxu0 0.0
    %230 = vmatmul.mubr.f32.gmra.mrb[0].mxu0 %v128
    %v231 = vpop.f32.mrb[0].mxu0
    %v232 = vadd.f32 %v110, %v231
    %v233 = vpop.f32.mrb[0].mxu0
    %234 = vmatprep.mubr.f32.mxu0 0.0
    %235 = vmatmul.mubr.f32.gmra.mrb[0].mxu0 %v131
    %v236 = vpop.f32.mrb[0].mxu0
    %v237 = vadd.f32 %v110, %v236
    %v238 = vpop.f32.mrb[0].mxu0
    %239 = vmatprep.mubr.f32.mxu0 0.0
    %240 = vmatmul.mubr.f32.gmra.mrb[0].mxu0 %v134
    %v241 = vpop.f32.mrb[0].mxu0
    %v242 = vadd.f32 %v110, %v241
    %v243 = vpop.f32.mrb[0].mxu0
    %244 = vdwg.mxu0
    %v245 = vld [vmem:[%s2 + $0x20] sm:$0xff]
    %vm246 = vcmask 64512
    %v248 = vsel %vm246, 0.0, 0
    %250 = vmatprep.subr.mxu0 0.0
    %251 = vmatpush1.msra.mxu0 %v245
    %252 = vmatprep.subr.mxu0 0.0
    %253 = vmatpush1.msra.mxu0 0.0
    %254 = vmatprep.subr.mxu0 0.0
    %255 = vmatpush1.msra.mxu0 0.0
    %256 = vmatprep.subr.mxu0 0.0
    %257 = vmatpush1.msra.mxu0 0.0
    %258 = vmatprep.subr.mxu0 0.0
    %259 = vmatpush1.msra.mxu0 0.0
    %260 = vmatprep.subr.mxu0 0.0
    %261 = vmatpush1.msra.mxu0 0.0
    %262 = vmatprep.subr.mxu0 0.0
    %263 = vmatpush1.msra.mxu0 0.0
    %264 = vmatprep.subr.mxu0 0.0
    %265 = vmatpush1.msra.mxu0 0.0
    %266 = vmatprep.subr.mxu0 0.0
    %267 = vmatpush1.msra.mxu0 0.0
    %268 = vmatprep.subr.mxu0 0.0
    %269 = vmatpush1.msra.mxu0 0.0
    %270 = vmatprep.subr.mxu0 0.0
    %271 = vmatpush1.msra.mxu0 0.0
    %272 = vmatprep.subr.mxu0 0.0
    %273 = vmatpush1.msra.mxu0 0.0
    %274 = vmatprep.subr.mxu0 0.0
    %275 = vmatpush1.msra.mxu0 0.0
    %276 = vmatprep.subr.mxu0 0.0
    %277 = vmatpush1.msra.mxu0 0.0
    %278 = vmatprep.subr.mxu0 0.0
    %279 = vmatpush1.msra.mxu0 0.0
    %280 = vmatprep.subr.mxu0 0.0
    %281 = vmatpush1.msra.mxu0 0.0
    %282 = vmatprep.subr.mxu0 0.0
    %283 = vmatpush1.msra.mxu0 0.0
    %284 = vmatprep.subr.mxu0 0.0
    %285 = vmatpush1.msra.mxu0 0.0
    %286 = vmatprep.subr.mxu0 0.0
    %287 = vmatpush1.msra.mxu0 0.0
    %288 = vmatprep.subr.mxu0 0.0
    %289 = vmatpush1.msra.mxu0 0.0
    %290 = vmatprep.subr.mxu0 0.0
    %291 = vmatpush1.msra.mxu0 0.0
    %292 = vmatprep.subr.mxu0 0.0
    %293 = vmatpush1.msra.mxu0 0.0
    %294 = vmatprep.subr.mxu0 0.0
    %295 = vmatpush1.msra.mxu0 0.0
    %296 = vmatprep.subr.mxu0 0.0
    %297 = vmatpush1.msra.mxu0 0.0
    %298 = vmatprep.subr.mxu0 0.0
    %299 = vmatpush1.msra.mxu0 0.0
    %300 = vmatprep.subr.mxu0 0.0
    %301 = vmatpush1.msra.mxu0 0.0
    %302 = vmatprep.subr.mxu0 0.0
    %303 = vmatpush1.msra.mxu0 0.0
    %304 = vmatprep.subr.mxu0 0.0
    %305 = vmatpush1.msra.mxu0 0.0
    %306 = vmatprep.subr.mxu0 0.0
    %307 = vmatpush1.msra.mxu0 0.0
    %308 = vmatprep.subr.mxu0 0.0
    %309 = vmatpush1.msra.mxu0 0.0
    %310 = vmatprep.subr.mxu0 0.0
    %311 = vmatpush1.msra.mxu0 0.0
    %312 = vmatprep.subr.mxu0 0.0
    %313 = vmatpush1.msra.mxu0 0.0
    %314 = vmatprep.mubr.f32.mxu0 0.0
    %315 = vmatmul.mubr.f32.gmra.mrb[0].mxu0 %v248
    %v316 = vpop.f32.mrb[0].mxu0
    %v317 = vadd.f32 0.0, %v316
    %v318 = vpop.f32.mrb[0].mxu0
    %319 = vdwg.mxu0
    %v320 = vadd.f32 %v207, %v317
    %v321 = vxor.u32 %v320, 2147483648
    %v322 = vmul.f32 %v321, 1.442695
    %v323 = vpow.pop %v322
    %v324 = vadd.f32 %v323, 1.0
    %v325 = vrcp.pop %v324
    %v326 = vmul.f32 1.0, %v325
    %v327 = vtanh.pop %v320
    %v328 = vmul.f32 %v326, 0.0
    %330 = vrot.lane.b32.xlu0 %v327, 104
    %v331 = vpop.permute.xlu0 %330
    %v333 = vmul.f32 %v326, %v331
    %335 = vrot.lane.b32.xlu0 %v333, 8
    %v336 = vpop.permute.xlu0 %335
    %v338 = vadd.f32 %v328, %v336
    %v339 = vtanh.pop %v338
    %341 = vrot.lane.b32.xlu0 %v339, 8
    %v342 = vpop.permute.xlu0 %341
    %v344 = vmul.f32 %v326, %v342
    %346 = vrot.lane.b32.xlu0 %v344, 112
    %v347 = vpop.permute.xlu0 %346
    %v348 = vsel %vm246, %v347, 0
    %350 = vmatprep.subr.mxu0 0.0
    %351 = vmatpush1.msra.mxu0 %v245
    %352 = vmatprep.subr.mxu0 0.0
    %353 = vmatpush1.msra.mxu0 0.0
    %354 = vmatprep.subr.mxu0 0.0
    %355 = vmatpush1.msra.mxu0 0.0
    %356 = vmatprep.subr.mxu0 0.0
    %357 = vmatpush1.msra.mxu0 0.0
    %358 = vmatprep.subr.mxu0 0.0
    %359 = vmatpush1.msra.mxu0 0.0
    %360 = vmatprep.subr.mxu0 0.0
    %361 = vmatpush1.msra.mxu0 0.0
    %362 = vmatprep.subr.mxu0 0.0
    %363 = vmatpush1.msra.mxu0 0.0
    %364 = vmatprep.subr.mxu0 0.0
    %365 = vmatpush1.msra.mxu0 0.0
    %366 = vmatprep.subr.mxu0 0.0
    %367 = vmatpush1.msra.mxu0 0.0
    %368 = vmatprep.subr.mxu0 0.0
    %369 = vmatpush1.msra.mxu0 0.0
    %370 = vmatprep.subr.mxu0 0.0
    %371 = vmatpush1.msra.mxu0 0.0
    %372 = vmatprep.subr.mxu0 0.0
    %373 = vmatpush1.msra.mxu0 0.0
    %374 = vmatprep.subr.mxu0 0.0
    %375 = vmatpush1.msra.mxu0 0.0
    %376 = vmatprep.subr.mxu0 0.0
    %377 = vmatpush1.msra.mxu0 0.0
    %378 = vmatprep.subr.mxu0 0.0
    %379 = vmatpush1.msra.mxu0 0.0
    %380 = vmatprep.subr.mxu0 0.0
    %381 = vmatpush1.msra.mxu0 0.0
    %382 = vmatprep.subr.mxu0 0.0
    %383 = vmatpush1.msra.mxu0 0.0
    %384 = vmatprep.subr.mxu0 0.0
    %385 = vmatpush1.msra.mxu0 0.0
    %386 = vmatprep.subr.mxu0 0.0
    %387 = vmatpush1.msra.mxu0 0.0
    %388 = vmatprep.subr.mxu0 0.0
    %389 = vmatpush1.msra.mxu0 0.0
    %390 = vmatprep.subr.mxu0 0.0
    %391 = vmatpush1.msra.mxu0 0.0
    %392 = vmatprep.subr.mxu0 0.0
    %393 = vmatpush1.msra.mxu0 0.0
    %394 = vmatprep.subr.mxu0 0.0
    %395 = vmatpush1.msra.mxu0 0.0
    %396 = vmatprep.subr.mxu0 0.0
    %397 = vmatpush1.msra.mxu0 0.0
    %398 = vmatprep.subr.mxu0 0.0
    %399 = vmatpush1.msra.mxu0 0.0
    %400 = vmatprep.subr.mxu0 0.0
    %401 = vmatpush1.msra.mxu0 0.0
    %402 = vmatprep.subr.mxu0 0.0
    %403 = vmatpush1.msra.mxu0 0.0
    %404 = vmatprep.subr.mxu0 0.0
    %405 = vmatpush1.msra.mxu0 0.0
    %406 = vmatprep.subr.mxu0 0.0
    %407 = vmatpush1.msra.mxu0 0.0
    %408 = vmatprep.subr.mxu0 0.0
    %409 = vmatpush1.msra.mxu0 0.0
    %410 = vmatprep.subr.mxu0 0.0
    %411 = vmatpush1.msra.mxu0 0.0
    %412 = vmatprep.subr.mxu0 0.0
    %413 = vmatpush1.msra.mxu0 0.0
    %414 = vmatprep.mubr.f32.mxu0 0.0
    %415 = vmatmul.mubr.f32.gmra.mrb[0].mxu0 %v348
    %v416 = vpop.f32.mrb[0].mxu0
    %v417 = vadd.f32 0.0, %v416
    %v418 = vpop.f32.mrb[0].mxu0
    %419 = vdwg.mxu0
    %v420 = vadd.f32 %v212, %v417
    %v421 = vxor.u32 %v420, 2147483648
    %v422 = vmul.f32 %v421, 1.442695
    %v423 = vpow.pop %v422
    %v424 = vadd.f32 %v423, 1.0
    %v425 = vrcp.pop %v424
    %v426 = vmul.f32 1.0, %v425
    %v427 = vtanh.pop %v420
    %v428 = vmul.f32 %v426, %v338
    %430 = vrot.lane.b32.xlu0 %v427, 104
    %v431 = vpop.permute.xlu0 %430
    %v433 = vmul.f32 %v426, %v431
    %435 = vrot.lane.b32.xlu0 %v433, 8
    %v436 = vpop.permute.xlu0 %435
    %v438 = vadd.f32 %v428, %v436
    %v439 = vtanh.pop %v438
    %441 = vrot.lane.b32.xlu0 %v439, 8
    %v442 = vpop.permute.xlu0 %441
    %v444 = vmul.f32 %v426, %v442
    %446 = vrot.lane.b32.xlu0 %v444, 112
    %v447 = vpop.permute.xlu0 %446
    %v448 = vsel %vm246, %v447, 0
    %450 = vmatprep.subr.mxu0 0.0
    %451 = vmatpush1.msra.mxu0 %v245
    %452 = vmatprep.subr.mxu0 0.0
    %453 = vmatpush1.msra.mxu0 0.0
    %454 = vmatprep.subr.mxu0 0.0
    %455 = vmatpush1.msra.mxu0 0.0
    %456 = vmatprep.subr.mxu0 0.0
    %457 = vmatpush1.msra.mxu0 0.0
    %458 = vmatprep.subr.mxu0 0.0
    %459 = vmatpush1.msra.mxu0 0.0
    %460 = vmatprep.subr.mxu0 0.0
    %461 = vmatpush1.msra.mxu0 0.0
    %462 = vmatprep.subr.mxu0 0.0
    %463 = vmatpush1.msra.mxu0 0.0
    %464 = vmatprep.subr.mxu0 0.0
    %465 = vmatpush1.msra.mxu0 0.0
    %466 = vmatprep.subr.mxu0 0.0
    %467 = vmatpush1.msra.mxu0 0.0
    %468 = vmatprep.subr.mxu0 0.0
    %469 = vmatpush1.msra.mxu0 0.0
    %470 = vmatprep.subr.mxu0 0.0
    %471 = vmatpush1.msra.mxu0 0.0
    %472 = vmatprep.subr.mxu0 0.0
    %473 = vmatpush1.msra.mxu0 0.0
    %474 = vmatprep.subr.mxu0 0.0
    %475 = vmatpush1.msra.mxu0 0.0
    %476 = vmatprep.subr.mxu0 0.0
    %477 = vmatpush1.msra.mxu0 0.0
    %478 = vmatprep.subr.mxu0 0.0
    %479 = vmatpush1.msra.mxu0 0.0
    %480 = vmatprep.subr.mxu0 0.0
    %481 = vmatpush1.msra.mxu0 0.0
    %482 = vmatprep.subr.mxu0 0.0
    %483 = vmatpush1.msra.mxu0 0.0
    %484 = vmatprep.subr.mxu0 0.0
    %485 = vmatpush1.msra.mxu0 0.0
    %486 = vmatprep.subr.mxu0 0.0
    %487 = vmatpush1.msra.mxu0 0.0
    %488 = vmatprep.subr.mxu0 0.0
    %489 = vmatpush1.msra.mxu0 0.0
    %490 = vmatprep.subr.mxu0 0.0
    %491 = vmatpush1.msra.mxu0 0.0
    %492 = vmatprep.subr.mxu0 0.0
    %493 = vmatpush1.msra.mxu0 0.0
    %494 = vmatprep.subr.mxu0 0.0
    %495 = vmatpush1.msra.mxu0 0.0
    %496 = vmatprep.subr.mxu0 0.0
    %497 = vmatpush1.msra.mxu0 0.0
    %498 = vmatprep.subr.mxu0 0.0
    %499 = vmatpush1.msra.mxu0 0.0
    %500 = vmatprep.subr.mxu0 0.0
    %501 = vmatpush1.msra.mxu0 0.0
    %502 = vmatprep.subr.mxu0 0.0
    %503 = vmatpush1.msra.mxu0 0.0
    %504 = vmatprep.subr.mxu0 0.0
    %505 = vmatpush1.msra.mxu0 0.0
    %506 = vmatprep.subr.mxu0 0.0
    %507 = vmatpush1.msra.mxu0 0.0
    %508 = vmatprep.subr.mxu0 0.0
    %509 = vmatpush1.msra.mxu0 0.0
    %510 = vmatprep.subr.mxu0 0.0
    %511 = vmatpush1.msra.mxu0 0.0
    %512 = vmatprep.subr.mxu0 0.0
    %513 = vmatpush1.msra.mxu0 0.0
    %514 = vmatprep.mubr.f32.mxu0 0.0
    %515 = vmatmul.mubr.f32.gmra.mrb[0].mxu0 %v448
    %v516 = vpop.f32.mrb[0].mxu0
    %v517 = vadd.f32 0.0, %v516
    %v518 = vpop.f32.mrb[0].mxu0
    %519 = vdwg.mxu0
    %v520 = vadd.f32 %v217, %v517
    %v521 = vxor.u32 %v520, 2147483648
    %v522 = vmul.f32 %v521, 1.442695
    %v523 = vpow.pop %v522
    %v524 = vadd.f32 %v523, 1.0
    %v525 = vrcp.pop %v524
    %v526 = vmul.f32 1.0, %v525
    %v527 = vtanh.pop %v520
    %v528 = vmul.f32 %v526, %v438
    %530 = vrot.lane.b32.xlu0 %v527, 104
    %v531 = vpop.permute.xlu0 %530
    %v533 = vmul.f32 %v526, %v531
    %535 = vrot.lane.b32.xlu0 %v533, 8
    %v536 = vpop.permute.xlu0 %535
    %v538 = vadd.f32 %v528, %v536
    %v539 = vtanh.pop %v538
    %541 = vrot.lane.b32.xlu0 %v539, 8
    %v542 = vpop.permute.xlu0 %541
    %v544 = vmul.f32 %v526, %v542
    %546 = vrot.lane.b32.xlu0 %v544, 112
    %v547 = vpop.permute.xlu0 %546
    %v548 = vsel %vm246, %v547, 0
    %550 = vmatprep.subr.mxu0 0.0
    %551 = vmatpush1.msra.mxu0 %v245
    %552 = vmatprep.subr.mxu0 0.0
    %553 = vmatpush1.msra.mxu0 0.0
    %554 = vmatprep.subr.mxu0 0.0
    %555 = vmatpush1.msra.mxu0 0.0
    %556 = vmatprep.subr.mxu0 0.0
    %557 = vmatpush1.msra.mxu0 0.0
    %558 = vmatprep.subr.mxu0 0.0
    %559 = vmatpush1.msra.mxu0 0.0
    %560 = vmatprep.subr.mxu0 0.0
    %561 = vmatpush1.msra.mxu0 0.0
    %562 = vmatprep.subr.mxu0 0.0
    %563 = vmatpush1.msra.mxu0 0.0
    %564 = vmatprep.subr.mxu0 0.0
    %565 = vmatpush1.msra.mxu0 0.0
    %566 = vmatprep.subr.mxu0 0.0
    %567 = vmatpush1.msra.mxu0 0.0
    %568 = vmatprep.subr.mxu0 0.0
    %569 = vmatpush1.msra.mxu0 0.0
    %570 = vmatprep.subr.mxu0 0.0
    %571 = vmatpush1.msra.mxu0 0.0
    %572 = vmatprep.subr.mxu0 0.0
    %573 = vmatpush1.msra.mxu0 0.0
    %574 = vmatprep.subr.mxu0 0.0
    %575 = vmatpush1.msra.mxu0 0.0
    %576 = vmatprep.subr.mxu0 0.0
    %577 = vmatpush1.msra.mxu0 0.0
    %578 = vmatprep.subr.mxu0 0.0
    %579 = vmatpush1.msra.mxu0 0.0
    %580 = vmatprep.subr.mxu0 0.0
    %581 = vmatpush1.msra.mxu0 0.0
    %582 = vmatprep.subr.mxu0 0.0
    %583 = vmatpush1.msra.mxu0 0.0
    %584 = vmatprep.subr.mxu0 0.0
    %585 = vmatpush1.msra.mxu0 0.0
    %586 = vmatprep.subr.mxu0 0.0
    %587 = vmatpush1.msra.mxu0 0.0
    %588 = vmatprep.subr.mxu0 0.0
    %589 = vmatpush1.msra.mxu0 0.0
    %590 = vmatprep.subr.mxu0 0.0
    %591 = vmatpush1.msra.mxu0 0.0
    %592 = vmatprep.subr.mxu0 0.0
    %593 = vmatpush1.msra.mxu0 0.0
    %594 = vmatprep.subr.mxu0 0.0
    %595 = vmatpush1.msra.mxu0 0.0
    %596 = vmatprep.subr.mxu0 0.0
    %597 = vmatpush1.msra.mxu0 0.0
    %598 = vmatprep.subr.mxu0 0.0
    %599 = vmatpush1.msra.mxu0 0.0
    %600 = vmatprep.subr.mxu0 0.0
    %601 = vmatpush1.msra.mxu0 0.0
    %602 = vmatprep.subr.mxu0 0.0
    %603 = vmatpush1.msra.mxu0 0.0
    %604 = vmatprep.subr.mxu0 0.0
    %605 = vmatpush1.msra.mxu0 0.0
    %606 = vmatprep.subr.mxu0 0.0
    %607 = vmatpush1.msra.mxu0 0.0
    %608 = vmatprep.subr.mxu0 0.0
    %609 = vmatpush1.msra.mxu0 0.0
    %610 = vmatprep.subr.mxu0 0.0
    %611 = vmatpush1.msra.mxu0 0.0
    %612 = vmatprep.subr.mxu0 0.0
    %613 = vmatpush1.msra.mxu0 0.0
    %614 = vmatprep.mubr.f32.mxu0 0.0
    %615 = vmatmul.mubr.f32.gmra.mrb[0].mxu0 %v548
    %v616 = vpop.f32.mrb[0].mxu0
    %v617 = vadd.f32 0.0, %v616
    %v618 = vpop.f32.mrb[0].mxu0
    %619 = vdwg.mxu0
    %v620 = vadd.f32 %v222, %v617
    %v621 = vxor.u32 %v620, 2147483648
    %v622 = vmul.f32 %v621, 1.442695
    %v623 = vpow.pop %v622
    %v624 = vadd.f32 %v623, 1.0
    %v625 = vrcp.pop %v624
    %v626 = vmul.f32 1.0, %v625
    %v627 = vtanh.pop %v620
    %v628 = vmul.f32 %v626, %v538
    %630 = vrot.lane.b32.xlu0 %v627, 104
    %v631 = vpop.permute.xlu0 %630
    %v633 = vmul.f32 %v626, %v631
    %635 = vrot.lane.b32.xlu0 %v633, 8
    %v636 = vpop.permute.xlu0 %635
    %v638 = vadd.f32 %v628, %v636
    %v639 = vtanh.pop %v638
    %641 = vrot.lane.b32.xlu0 %v639, 8
    %v642 = vpop.permute.xlu0 %641
    %v644 = vmul.f32 %v626, %v642
    %646 = vrot.lane.b32.xlu0 %v644, 112
    %v647 = vpop.permute.xlu0 %646
    %v648 = vsel %vm246, %v647, 0
    %650 = vmatprep.subr.mxu0 0.0
    %651 = vmatpush1.msra.mxu0 %v245
    %652 = vmatprep.subr.mxu0 0.0
    %653 = vmatpush1.msra.mxu0 0.0
    %654 = vmatprep.subr.mxu0 0.0
    %655 = vmatpush1.msra.mxu0 0.0
    %656 = vmatprep.subr.mxu0 0.0
    %657 = vmatpush1.msra.mxu0 0.0
    %658 = vmatprep.subr.mxu0 0.0
    %659 = vmatpush1.msra.mxu0 0.0
    %660 = vmatprep.subr.mxu0 0.0
    %661 = vmatpush1.msra.mxu0 0.0
    %662 = vmatprep.subr.mxu0 0.0
    %663 = vmatpush1.msra.mxu0 0.0
    %664 = vmatprep.subr.mxu0 0.0
    %665 = vmatpush1.msra.mxu0 0.0
    %666 = vmatprep.subr.mxu0 0.0
    %667 = vmatpush1.msra.mxu0 0.0
    %668 = vmatprep.subr.mxu0 0.0
    %669 = vmatpush1.msra.mxu0 0.0
    %670 = vmatprep.subr.mxu0 0.0
    %671 = vmatpush1.msra.mxu0 0.0
    %672 = vmatprep.subr.mxu0 0.0
    %673 = vmatpush1.msra.mxu0 0.0
    %674 = vmatprep.subr.mxu0 0.0
    %675 = vmatpush1.msra.mxu0 0.0
    %676 = vmatprep.subr.mxu0 0.0
    %677 = vmatpush1.msra.mxu0 0.0
    %678 = vmatprep.subr.mxu0 0.0
    %679 = vmatpush1.msra.mxu0 0.0
    %680 = vmatprep.subr.mxu0 0.0
    %681 = vmatpush1.msra.mxu0 0.0
    %682 = vmatprep.subr.mxu0 0.0
    %683 = vmatpush1.msra.mxu0 0.0
    %684 = vmatprep.subr.mxu0 0.0
    %685 = vmatpush1.msra.mxu0 0.0
    %686 = vmatprep.subr.mxu0 0.0
    %687 = vmatpush1.msra.mxu0 0.0
    %688 = vmatprep.subr.mxu0 0.0
    %689 = vmatpush1.msra.mxu0 0.0
    %690 = vmatprep.subr.mxu0 0.0
    %691 = vmatpush1.msra.mxu0 0.0
    %692 = vmatprep.subr.mxu0 0.0
    %693 = vmatpush1.msra.mxu0 0.0
    %694 = vmatprep.subr.mxu0 0.0
    %695 = vmatpush1.msra.mxu0 0.0
    %696 = vmatprep.subr.mxu0 0.0
    %697 = vmatpush1.msra.mxu0 0.0
    %698 = vmatprep.subr.mxu0 0.0
    %699 = vmatpush1.msra.mxu0 0.0
    %700 = vmatprep.subr.mxu0 0.0
    %701 = vmatpush1.msra.mxu0 0.0
    %702 = vmatprep.subr.mxu0 0.0
    %703 = vmatpush1.msra.mxu0 0.0
    %704 = vmatprep.subr.mxu0 0.0
    %705 = vmatpush1.msra.mxu0 0.0
    %706 = vmatprep.subr.mxu0 0.0
    %707 = vmatpush1.msra.mxu0 0.0
    %708 = vmatprep.subr.mxu0 0.0
    %709 = vmatpush1.msra.mxu0 0.0
    %710 = vmatprep.subr.mxu0 0.0
    %711 = vmatpush1.msra.mxu0 0.0
    %712 = vmatprep.subr.mxu0 0.0
    %713 = vmatpush1.msra.mxu0 0.0
    %714 = vmatprep.mubr.f32.mxu0 0.0
    %715 = vmatmul.mubr.f32.gmra.mrb[0].mxu0 %v648
    %v716 = vpop.f32.mrb[0].mxu0
    %v717 = vadd.f32 0.0, %v716
    %v718 = vpop.f32.mrb[0].mxu0
    %719 = vdwg.mxu0
    %v720 = vadd.f32 %v227, %v717
    %v721 = vxor.u32 %v720, 2147483648
    %v722 = vmul.f32 %v721, 1.442695
    %v723 = vpow.pop %v722
    %v724 = vadd.f32 %v723, 1.0
    %v725 = vrcp.pop %v724
    %v726 = vmul.f32 1.0, %v725
    %v727 = vtanh.pop %v720
    %v728 = vmul.f32 %v726, %v638
    %730 = vrot.lane.b32.xlu0 %v727, 104
    %v731 = vpop.permute.xlu0 %730
    %v733 = vmul.f32 %v726, %v731
    %735 = vrot.lane.b32.xlu0 %v733, 8
    %v736 = vpop.permute.xlu0 %735
    %v738 = vadd.f32 %v728, %v736
    %v739 = vtanh.pop %v738
    %741 = vrot.lane.b32.xlu0 %v739, 8
    %v742 = vpop.permute.xlu0 %741
    %v744 = vmul.f32 %v726, %v742
    %746 = vrot.lane.b32.xlu0 %v744, 112
    %v747 = vpop.permute.xlu0 %746
    %v748 = vsel %vm246, %v747, 0
    %750 = vmatprep.subr.mxu0 0.0
    %751 = vmatpush1.msra.mxu0 %v245
    %752 = vmatprep.subr.mxu0 0.0
    %753 = vmatpush1.msra.mxu0 0.0
    %754 = vmatprep.subr.mxu0 0.0
    %755 = vmatpush1.msra.mxu0 0.0
    %756 = vmatprep.subr.mxu0 0.0
    %757 = vmatpush1.msra.mxu0 0.0
    %758 = vmatprep.subr.mxu0 0.0
    %759 = vmatpush1.msra.mxu0 0.0
    %760 = vmatprep.subr.mxu0 0.0
    %761 = vmatpush1.msra.mxu0 0.0
    %762 = vmatprep.subr.mxu0 0.0
    %763 = vmatpush1.msra.mxu0 0.0
    %764 = vmatprep.subr.mxu0 0.0
    %765 = vmatpush1.msra.mxu0 0.0
    %766 = vmatprep.subr.mxu0 0.0
    %767 = vmatpush1.msra.mxu0 0.0
    %768 = vmatprep.subr.mxu0 0.0
    %769 = vmatpush1.msra.mxu0 0.0
    %770 = vmatprep.subr.mxu0 0.0
    %771 = vmatpush1.msra.mxu0 0.0
    %772 = vmatprep.subr.mxu0 0.0
    %773 = vmatpush1.msra.mxu0 0.0
    %774 = vmatprep.subr.mxu0 0.0
    %775 = vmatpush1.msra.mxu0 0.0
    %776 = vmatprep.subr.mxu0 0.0
    %777 = vmatpush1.msra.mxu0 0.0
    %778 = vmatprep.subr.mxu0 0.0
    %779 = vmatpush1.msra.mxu0 0.0
    %780 = vmatprep.subr.mxu0 0.0
    %781 = vmatpush1.msra.mxu0 0.0
    %782 = vmatprep.subr.mxu0 0.0
    %783 = vmatpush1.msra.mxu0 0.0
    %784 = vmatprep.subr.mxu0 0.0
    %785 = vmatpush1.msra.mxu0 0.0
    %786 = vmatprep.subr.mxu0 0.0
    %787 = vmatpush1.msra.mxu0 0.0
    %788 = vmatprep.subr.mxu0 0.0
    %789 = vmatpush1.msra.mxu0 0.0
    %790 = vmatprep.subr.mxu0 0.0
    %791 = vmatpush1.msra.mxu0 0.0
    %792 = vmatprep.subr.mxu0 0.0
    %793 = vmatpush1.msra.mxu0 0.0
    %794 = vmatprep.subr.mxu0 0.0
    %795 = vmatpush1.msra.mxu0 0.0
    %796 = vmatprep.subr.mxu0 0.0
    %797 = vmatpush1.msra.mxu0 0.0
    %798 = vmatprep.subr.mxu0 0.0
    %799 = vmatpush1.msra.mxu0 0.0
    %800 = vmatprep.subr.mxu0 0.0
    %801 = vmatpush1.msra.mxu0 0.0
    %802 = vmatprep.subr.mxu0 0.0
    %803 = vmatpush1.msra.mxu0 0.0
    %804 = vmatprep.subr.mxu0 0.0
    %805 = vmatpush1.msra.mxu0 0.0
    %806 = vmatprep.subr.mxu0 0.0
    %807 = vmatpush1.msra.mxu0 0.0
    %808 = vmatprep.subr.mxu0 0.0
    %809 = vmatpush1.msra.mxu0 0.0
    %810 = vmatprep.subr.mxu0 0.0
    %811 = vmatpush1.msra.mxu0 0.0
    %812 = vmatprep.subr.mxu0 0.0
    %813 = vmatpush1.msra.mxu0 0.0
    %814 = vmatprep.mubr.f32.mxu0 0.0
    %815 = vmatmul.mubr.f32.gmra.mrb[0].mxu0 %v748
    %v816 = vpop.f32.mrb[0].mxu0
    %v817 = vadd.f32 0.0, %v816
    %v818 = vpop.f32.mrb[0].mxu0
    %819 = vdwg.mxu0
    %v820 = vadd.f32 %v232, %v817
    %v821 = vxor.u32 %v820, 2147483648
    %v822 = vmul.f32 %v821, 1.442695
    %v823 = vpow.pop %v822
    %v824 = vadd.f32 %v823, 1.0
    %v825 = vrcp.pop %v824
    %v826 = vmul.f32 1.0, %v825
    %v827 = vtanh.pop %v820
    %v828 = vmul.f32 %v826, %v738
    %830 = vrot.lane.b32.xlu0 %v827, 104
    %v831 = vpop.permute.xlu0 %830
    %v833 = vmul.f32 %v826, %v831
    %835 = vrot.lane.b32.xlu0 %v833, 8
    %v836 = vpop.permute.xlu0 %835
    %v838 = vadd.f32 %v828, %v836
    %v839 = vtanh.pop %v838
    %841 = vrot.lane.b32.xlu0 %v839, 8
    %v842 = vpop.permute.xlu0 %841
    %v844 = vmul.f32 %v826, %v842
    %846 = vrot.lane.b32.xlu0 %v844, 112
    %v847 = vpop.permute.xlu0 %846
    %v848 = vsel %vm246, %v847, 0
    %850 = vmatprep.subr.mxu0 0.0
    %851 = vmatpush1.msra.mxu0 %v245
    %852 = vmatprep.subr.mxu0 0.0
    %853 = vmatpush1.msra.mxu0 0.0
    %854 = vmatprep.subr.mxu0 0.0
    %855 = vmatpush1.msra.mxu0 0.0
    %856 = vmatprep.subr.mxu0 0.0
    %857 = vmatpush1.msra.mxu0 0.0
    %858 = vmatprep.subr.mxu0 0.0
    %859 = vmatpush1.msra.mxu0 0.0
    %860 = vmatprep.subr.mxu0 0.0
    %861 = vmatpush1.msra.mxu0 0.0
    %862 = vmatprep.subr.mxu0 0.0
    %863 = vmatpush1.msra.mxu0 0.0
    %864 = vmatprep.subr.mxu0 0.0
    %865 = vmatpush1.msra.mxu0 0.0
    %866 = vmatprep.subr.mxu0 0.0
    %867 = vmatpush1.msra.mxu0 0.0
    %868 = vmatprep.subr.mxu0 0.0
    %869 = vmatpush1.msra.mxu0 0.0
    %870 = vmatprep.subr.mxu0 0.0
    %871 = vmatpush1.msra.mxu0 0.0
    %872 = vmatprep.subr.mxu0 0.0
    %873 = vmatpush1.msra.mxu0 0.0
    %874 = vmatprep.subr.mxu0 0.0
    %875 = vmatpush1.msra.mxu0 0.0
    %876 = vmatprep.subr.mxu0 0.0
    %877 = vmatpush1.msra.mxu0 0.0
    %878 = vmatprep.subr.mxu0 0.0
    %879 = vmatpush1.msra.mxu0 0.0
    %880 = vmatprep.subr.mxu0 0.0
    %881 = vmatpush1.msra.mxu0 0.0
    %882 = vmatprep.subr.mxu0 0.0
    %883 = vmatpush1.msra.mxu0 0.0
    %884 = vmatprep.subr.mxu0 0.0
    %885 = vmatpush1.msra.mxu0 0.0
    %886 = vmatprep.subr.mxu0 0.0
    %887 = vmatpush1.msra.mxu0 0.0
    %888 = vmatprep.subr.mxu0 0.0
    %889 = vmatpush1.msra.mxu0 0.0
    %890 = vmatprep.subr.mxu0 0.0
    %891 = vmatpush1.msra.mxu0 0.0
    %892 = vmatprep.subr.mxu0 0.0
    %893 = vmatpush1.msra.mxu0 0.0
    %894 = vmatprep.subr.mxu0 0.0
    %895 = vmatpush1.msra.mxu0 0.0
    %896 = vmatprep.subr.mxu0 0.0
    %897 = vmatpush1.msra.mxu0 0.0
    %898 = vmatprep.subr.mxu0 0.0
    %899 = vmatpush1.msra.mxu0 0.0
    %900 = vmatprep.subr.mxu0 0.0
    %901 = vmatpush1.msra.mxu0 0.0
    %902 = vmatprep.subr.mxu0 0.0
    %903 = vmatpush1.msra.mxu0 0.0
    %904 = vmatprep.subr.mxu0 0.0
    %905 = vmatpush1.msra.mxu0 0.0
    %906 = vmatprep.subr.mxu0 0.0
    %907 = vmatpush1.msra.mxu0 0.0
    %908 = vmatprep.subr.mxu0 0.0
    %909 = vmatpush1.msra.mxu0 0.0
    %910 = vmatprep.subr.mxu0 0.0
    %911 = vmatpush1.msra.mxu0 0.0
    %912 = vmatprep.subr.mxu0 0.0
    %913 = vmatpush1.msra.mxu0 0.0
    %914 = vmatprep.mubr.f32.mxu0 0.0
    %915 = vmatmul.mubr.f32.gmra.mrb[0].mxu0 %v848
    %v916 = vpop.f32.mrb[0].mxu0
    %v917 = vadd.f32 0.0, %v916
    %v918 = vpop.f32.mrb[0].mxu0
    %919 = vdwg.mxu0
    %v920 = vadd.f32 %v237, %v917
    %v921 = vxor.u32 %v920, 2147483648
    %v922 = vmul.f32 %v921, 1.442695
    %v923 = vpow.pop %v922
    %v924 = vadd.f32 %v923, 1.0
    %v925 = vrcp.pop %v924
    %v926 = vmul.f32 1.0, %v925
    %v927 = vtanh.pop %v920
    %v928 = vmul.f32 %v926, %v838
    %930 = vrot.lane.b32.xlu0 %v927, 104
    %v931 = vpop.permute.xlu0 %930
    %v933 = vmul.f32 %v926, %v931
    %935 = vrot.lane.b32.xlu0 %v933, 8
    %v936 = vpop.permute.xlu0 %935
    %v938 = vadd.f32 %v928, %v936
    %v939 = vtanh.pop %v938
    %941 = vrot.lane.b32.xlu0 %v939, 8
    %v942 = vpop.permute.xlu0 %941
    %v944 = vmul.f32 %v926, %v942
    %946 = vrot.lane.b32.xlu0 %v944, 112
    %v947 = vpop.permute.xlu0 %946
    %v948 = vsel %vm246, %v947, 0
    %950 = vmatprep.subr.mxu0 0.0
    %951 = vmatpush1.msra.mxu0 %v245
    %952 = vmatprep.subr.mxu0 0.0
    %953 = vmatpush1.msra.mxu0 0.0
    %954 = vmatprep.subr.mxu0 0.0
    %955 = vmatpush1.msra.mxu0 0.0
    %956 = vmatprep.subr.mxu0 0.0
    %957 = vmatpush1.msra.mxu0 0.0
    %958 = vmatprep.subr.mxu0 0.0
    %959 = vmatpush1.msra.mxu0 0.0
    %960 = vmatprep.subr.mxu0 0.0
    %961 = vmatpush1.msra.mxu0 0.0
    %962 = vmatprep.subr.mxu0 0.0
    %963 = vmatpush1.msra.mxu0 0.0
    %964 = vmatprep.subr.mxu0 0.0
    %965 = vmatpush1.msra.mxu0 0.0
    %966 = vmatprep.subr.mxu0 0.0
    %967 = vmatpush1.msra.mxu0 0.0
    %968 = vmatprep.subr.mxu0 0.0
    %969 = vmatpush1.msra.mxu0 0.0
    %970 = vmatprep.subr.mxu0 0.0
    %971 = vmatpush1.msra.mxu0 0.0
    %972 = vmatprep.subr.mxu0 0.0
    %973 = vmatpush1.msra.mxu0 0.0
    %974 = vmatprep.subr.mxu0 0.0
    %975 = vmatpush1.msra.mxu0 0.0
    %976 = vmatprep.subr.mxu0 0.0
    %977 = vmatpush1.msra.mxu0 0.0
    %978 = vmatprep.subr.mxu0 0.0
    %979 = vmatpush1.msra.mxu0 0.0
    %980 = vmatprep.subr.mxu0 0.0
    %981 = vmatpush1.msra.mxu0 0.0
    %982 = vmatprep.subr.mxu0 0.0
    %983 = vmatpush1.msra.mxu0 0.0
    %984 = vmatprep.subr.mxu0 0.0
    %985 = vmatpush1.msra.mxu0 0.0
    %986 = vmatprep.subr.mxu0 0.0
    %987 = vmatpush1.msra.mxu0 0.0
    %988 = vmatprep.subr.mxu0 0.0
    %989 = vmatpush1.msra.mxu0 0.0
    %990 = vmatprep.subr.mxu0 0.0
    %991 = vmatpush1.msra.mxu0 0.0
    %992 = vmatprep.subr.mxu0 0.0
    %993 = vmatpush1.msra.mxu0 0.0
    %994 = vmatprep.subr.mxu0 0.0
    %995 = vmatpush1.msra.mxu0 0.0
    %996 = vmatprep.subr.mxu0 0.0
    %997 = vmatpush1.msra.mxu0 0.0
    %998 = vmatprep.subr.mxu0 0.0
    %999 = vmatpush1.msra.mxu0 0.0
    %1000 = vmatprep.subr.mxu0 0.0
    %1001 = vmatpush1.msra.mxu0 0.0
    %1002 = vmatprep.subr.mxu0 0.0
    %1003 = vmatpush1.msra.mxu0 0.0
    %1004 = vmatprep.subr.mxu0 0.0
    %1005 = vmatpush1.msra.mxu0 0.0
    %1006 = vmatprep.subr.mxu0 0.0
    %1007 = vmatpush1.msra.mxu0 0.0
    %1008 = vmatprep.subr.mxu0 0.0
    %1009 = vmatpush1.msra.mxu0 0.0
    %1010 = vmatprep.subr.mxu0 0.0
    %1011 = vmatpush1.msra.mxu0 0.0
    %1012 = vmatprep.subr.mxu0 0.0
    %1013 = vmatpush1.msra.mxu0 0.0
    %1014 = vmatprep.mubr.f32.mxu0 0.0
    %1015 = vmatmul.mubr.f32.gmra.mrb[0].mxu0 %v948
    %v1016 = vpop.f32.mrb[0].mxu0
    %v1017 = vadd.f32 0.0, %v1016
    %v1018 = vpop.f32.mrb[0].mxu0
    %1019 = vdwg.mxu0
    %v1020 = vadd.f32 %v242, %v1017
    %v1021 = vxor.u32 %v1020, 2147483648
    %v1022 = vmul.f32 %v1021, 1.442695
    %v1023 = vpow.pop %v1022
    %v1024 = vadd.f32 %v1023, 1.0
    %v1025 = vrcp.pop %v1024
    %v1026 = vmul.f32 1.0, %v1025
    %v1027 = vtanh.pop %v1020
    %v1028 = vmul.f32 %v1026, %v938
    %1030 = vrot.lane.b32.xlu0 %v1027, 104
    %v1031 = vpop.permute.xlu0 %1030
    %v1033 = vmul.f32 %v1026, %v1031
    %1035 = vrot.lane.b32.xlu0 %v1033, 8
    %v1036 = vpop.permute.xlu0 %1035
    %v1038 = vadd.f32 %v1028, %v1036
    %v1039 = vtanh.pop %v1038
    %1041 = vrot.lane.b32.xlu0 %v1039, 8
    %v1042 = vpop.permute.xlu0 %1041
    %v1044 = vmul.f32 %v1026, %v1042
    %v1045 = vld [vmem:[%s2 + $0x30] sm:$0xff]
    %1047 = vrot.lane.b32.xlu0 %v1044, 112
    %v1048 = vpop.permute.xlu0 %1047
    %1050 = vrot.lane.b32.xlu0 %v94, 124
    %v1051 = vpop.permute.xlu0 %1050
    %v1053 = vsel %vm246, %v1048, 0
    %1055 = vmatprep.subr.mxu0 0.0
    %1056 = vmatpush1.msra.mxu0 %v1045
    %1057 = vmatprep.subr.mxu0 0.0
    %1058 = vmatpush1.msra.mxu0 0.0
    %1059 = vmatprep.subr.mxu0 0.0
    %1060 = vmatpush1.msra.mxu0 0.0
    %1061 = vmatprep.subr.mxu0 0.0
    %1062 = vmatpush1.msra.mxu0 0.0
    %1063 = vmatprep.subr.mxu0 0.0
    %1064 = vmatpush1.msra.mxu0 0.0
    %1065 = vmatprep.subr.mxu0 0.0
    %1066 = vmatpush1.msra.mxu0 0.0
    %1067 = vmatprep.subr.mxu0 0.0
    %1068 = vmatpush1.msra.mxu0 0.0
    %1069 = vmatprep.subr.mxu0 0.0
    %1070 = vmatpush1.msra.mxu0 0.0
    %1071 = vmatprep.subr.mxu0 0.0
    %1072 = vmatpush1.msra.mxu0 0.0
    %1073 = vmatprep.subr.mxu0 0.0
    %1074 = vmatpush1.msra.mxu0 0.0
    %1075 = vmatprep.subr.mxu0 0.0
    %1076 = vmatpush1.msra.mxu0 0.0
    %1077 = vmatprep.subr.mxu0 0.0
    %1078 = vmatpush1.msra.mxu0 0.0
    %1079 = vmatprep.subr.mxu0 0.0
    %1080 = vmatpush1.msra.mxu0 0.0
    %1081 = vmatprep.subr.mxu0 0.0
    %1082 = vmatpush1.msra.mxu0 0.0
    %1083 = vmatprep.subr.mxu0 0.0
    %1084 = vmatpush1.msra.mxu0 0.0
    %1085 = vmatprep.subr.mxu0 0.0
    %1086 = vmatpush1.msra.mxu0 0.0
    %1087 = vmatprep.subr.mxu0 0.0
    %1088 = vmatpush1.msra.mxu0 0.0
    %1089 = vmatprep.subr.mxu0 0.0
    %1090 = vmatpush1.msra.mxu0 0.0
    %1091 = vmatprep.subr.mxu0 0.0
    %1092 = vmatpush1.msra.mxu0 0.0
    %1093 = vmatprep.subr.mxu0 0.0
    %1094 = vmatpush1.msra.mxu0 0.0
    %1095 = vmatprep.subr.mxu0 0.0
    %1096 = vmatpush1.msra.mxu0 0.0
    %1097 = vmatprep.subr.mxu0 0.0
    %1098 = vmatpush1.msra.mxu0 0.0
    %1099 = vmatprep.subr.mxu0 0.0
    %1100 = vmatpush1.msra.mxu0 0.0
    %1101 = vmatprep.subr.mxu0 0.0
    %1102 = vmatpush1.msra.mxu0 0.0
    %1103 = vmatprep.subr.mxu0 0.0
    %1104 = vmatpush1.msra.mxu0 0.0
    %1105 = vmatprep.subr.mxu0 0.0
    %1106 = vmatpush1.msra.mxu0 0.0
    %1107 = vmatprep.subr.mxu0 0.0
    %1108 = vmatpush1.msra.mxu0 0.0
    %1109 = vmatprep.subr.mxu0 0.0
    %1110 = vmatpush1.msra.mxu0 0.0
    %1111 = vmatprep.subr.mxu0 0.0
    %1112 = vmatpush1.msra.mxu0 0.0
    %1113 = vmatprep.subr.mxu0 0.0
    %1114 = vmatpush1.msra.mxu0 0.0
    %1115 = vmatprep.subr.mxu0 0.0
    %1116 = vmatpush1.msra.mxu0 0.0
    %1117 = vmatprep.subr.mxu0 0.0
    %1118 = vmatpush1.msra.mxu0 0.0
    %1119 = vmatprep.mubr.f32.mxu0 0.0
    %1120 = vmatmul.mubr.f32.gmra.mrb[0].mxu0 %v1053
    %v1121 = vpop.f32.mrb[0].mxu0
    %v1122 = vadd.f32 %v1051, %v1121
    %v1123 = vpop.f32.mrb[0].mxu0
    %1124 = vdwg.mxu0
    %v1125 = vld [vmem:[%s2 + $0x38] sm:$0xff]
    %v1126 = vadd.f32 %v1122, %v1125
    %v1127 = vsel %vm111, %v1126, -inf
    %1128 = vmax.xlane.f32.xlu0 %v1127
    %v1129 = vpop.xlane.xlu0 %1128
    %v1130 = vsub.f32 %v1126, %v1129
    %v1131 = vmul.f32 %v1130, 1.442695
    %v1132 = vpow.pop %v1131
    %v1133 = vsel %vm111, %v1132, 0.0
    %1134 = vadd.xlane.f32.xlu0 %v1133
    %v1135 = vpop.xlane.xlu0 %1134
    %v1136 = vrcp.pop %v1135
    %v1137 = vmul.f32 %v1132, %v1136
    %v1138 = vmul.f32 %v94, %v1137
    %v1139 = vsel %vm111, %v1138, 0.0
    %1140 = vadd.xlane.f32.xlu0 %v1139
    %v1141 = vpop.xlane.xlu0 %1140
    %1143 = vrot.lane.b32.xlu0 %v1137, 4
    %v1144 = vpop.permute.xlu0 %1143
    %v1146 = vsel %vm111, %v94, %v1144
    %v1147 = vsel %vm246, %v1146, %v1141
    %vm1148 = vcmask 72704
    %1149 = vst.msk [vmem:[#allocation2] sm:$0xff] %vm1148, %v1147
    // Predicated region
    $region14: #{tpu_custom_call.1} parent=1 // pred_check
      _
    $region15: #{tpu_custom_call.1} parent=1 // pred_check_branch
      %1151 = sbr.rel (0) target = $region17
    $region16: #{tpu_custom_call.1} parent=1 // pred_region
      %s1153 = ssub.s32 128, 128
      %1154 = vsyncadd [#allocation3], %s1153
      %s1156 = sshll.u32 [#allocation2], 4
      %s1157 = int_to_ptr.vmem [resolvable:$true] %s1156
      %1159 = dma.vmem_to_hbm [thread:$0]  %s1157, 128, %s3, [#allocation3]
    $region17: #{tpu_custom_call.1} parent=1 // pred_fallthru
      _
    // Predicated region
    $region18: #{tpu_custom_call.1} parent=1 // pred_check
      _
    $region19: #{tpu_custom_call.1} parent=1 // pred_check_branch
      %1161 = sbr.rel (0) target = $region21
    $region20: #{tpu_custom_call.1} parent=1 // pred_region
      %1162 = dma.done [#allocation3], 128
    $region21: #{tpu_custom_call.1} parent=1 // pred_fallthru
      _
    %1163 = vsyncpa [#allocation3], 1

</llo_original>
